<compile_context>
chip_gen: v7x
topology: tpu7x:2x2x1
jax: 0.10.0
libtpu: 0.0.40
codegen_flags: <defaults>
</compile_context>

<pallas_src>
import jax
import jax.numpy as jnp
from jax.experimental import pallas as pl
from jax.experimental.pallas import tpu as pltpu

# "minus infinity" for padded class columns; finite so no inf-inf NaN hazards.
_NEG_BIG = -1e30
# Keep W fully VMEM-resident (one DMA total) below this size (v7x-safe).
_W_RESIDENT_BYTES = 4 * 1024 * 1024


def _round_up(x, m):
    return ((x + m - 1) // m) * m


def _make_ce_loss_kernel(tk, n_k, w_resident, matmul_dtype):
    """Grid = (batch tile i [parallel], D-reduction tile k [arbitrary, last]).

    x_ref    : (tm, tk)        f32 (stored dtype; cast to matmul_dtype in-kernel)
    w_ref    : (Dp, Kp) if w_resident else (tk, Kp)   matmul dtype
    b_ref    : (1, Kp)         f32   (padded class columns hold -1e30)
    t_ref    : (tm, 1)         i32
    preds_ref: (tm, Kp)        f32   VMEM-resident across k; doubles as the
                                     matmul accumulator (no scratch needed)
    nll_ref  : (tm, 1)         f32   per-row NLL, written on last k step only
    """

    def kernel(x_ref, w_ref, b_ref, t_ref, preds_ref, nll_ref):
        k = pl.program_id(1)

        @pl.when(k == 0)
        def _():
            preds_ref[...] = jnp.zeros_like(preds_ref)

        # Cast the block right before the MXU: HBM carries x once in its
        # stored dtype; the VALU cast co-issues and is free under the DMA
        # bottleneck.
        x_blk = x_ref[...].astype(matmul_dtype)
        if w_resident and n_k > 1:
            off = pl.multiple_of(k * tk, 128)
            w_blk = w_ref[pl.ds(off, tk), :]
        else:
            w_blk = w_ref[...]

        # Accumulate directly into the output block (same block index for
        # every k => it stays VMEM-resident across the reduction).
        preds_ref[...] += jnp.dot(x_blk, w_blk,
                                  preferred_element_type=jnp.float32)

        @pl.when(k == pl.num_programs(1) - 1)
        def _():
            logits = preds_ref[...] + b_ref[...]   # padded cols ~ -1e30
            preds_ref[...] = logits                # lane-dense final store

            # numerically stable log-sum-exp; padded columns contribute 0.
            m = jnp.max(logits, axis=-1, keepdims=True)
            z = logits - m
            lse = jnp.log(jnp.sum(jnp.exp(z), axis=-1, keepdims=True))  # (tm,1)

            # nll = lse - z[target]; gather via masked row sum.
            col = jax.lax.broadcasted_iota(jnp.int32, z.shape, 1)
            z_t = jnp.sum(jnp.where(col == t_ref[...], z, 0.0),
                          axis=-1, keepdims=True)                        # (tm,1)
            nll_ref[...] = lse - z_t

    return kernel


def loss_function_forward(inp, target, weight, bias, *,
                          matmul_dtype=jnp.bfloat16, tm=None, tk=None):
    """inp: (N,C,H,W) float; target: (N,) int; weight: (D,K); bias: (K,).
    Returns (loss: scalar f32, preds: (N, K) f32 logits)."""
    N = inp.shape[0]
    D, K = weight.shape
    x = inp.reshape(N, D)
    if x.dtype != jnp.float32:
        x = x.astype(jnp.float32)

    # --- tiling / padding ---------------------------------------------------
    Kp = _round_up(K, 128)                        # lane-dense class dimension
    if tk is None:                                # D-reduction tile (last axis)
        tk = min(2048, _round_up(D, 128))
    Dp = _round_up(D, tk)
    if tm is None:                                # batch tile (sublane dim)
        tm = min(256, _round_up(N, 8))
        # v7x megacore: the batch axis is the only "parallel" axis; make sure
        # there are >= 2 batch tiles whenever the batch is big enough.
        if N >= 256 and _round_up(N, tm) // tm < 2:
            tm = _round_up((N + 1) // 2, 8)
    Np = _round_up(N, tm)
    n_m, n_k = Np // tm, Dp // tk

    mm_bytes = jnp.dtype(matmul_dtype).itemsize
    w_resident = Dp * Kp * mm_bytes <= _W_RESIDENT_BYTES

    # x stays in its stored dtype (no pad+cast HBM pass unless shapes need it).
    x_p = x if (Np == N and Dp == D) else jnp.pad(x, ((0, Np - N), (0, Dp - D)))
    w_p = jnp.pad(weight.astype(matmul_dtype), ((0, Dp - D), (0, Kp - K)))
    # Padded class columns get a very negative bias so they never win the max
    # and contribute exp(...) = 0 to the log-sum-exp.
    b_p = jnp.pad(bias.astype(jnp.float32).reshape(1, K),
                  ((0, 0), (0, Kp - K)), constant_values=_NEG_BIG)
    t_p = jnp.pad(target.astype(jnp.int32), (0, Np - N)).reshape(Np, 1)

    if w_resident:
        w_spec = pl.BlockSpec((Dp, Kp), lambda i, k: (0, 0))   # one DMA total
    else:
        w_spec = pl.BlockSpec((tk, Kp), lambda i, k: (k, 0))

    cost = pl.CostEstimate(
        flops=2 * Np * Dp * Kp,
        transcendentals=Np * Kp + Np,                  # exp + per-row log
        bytes_accessed=Np * Dp * 4                     # x read (f32)
        + Dp * Kp * mm_bytes * (1 if w_resident else n_m)
        + Np * Kp * 4 + Kp * 4 + 2 * Np * 4,           # preds, bias, tgt, nll
    )

    preds_p, nll_p = pl.pallas_call(
        _make_ce_loss_kernel(tk, n_k, w_resident, matmul_dtype),
        out_shape=(
            jax.ShapeDtypeStruct((Np, Kp), jnp.float32),   # padded logits
            jax.ShapeDtypeStruct((Np, 1), jnp.float32),    # per-row NLL
        ),
        grid=(n_m, n_k),
        in_specs=[
            pl.BlockSpec((tm, tk), lambda i, k: (i, k)),   # x (stored dtype)
            w_spec,                                        # W (bf16)
            pl.BlockSpec((1, Kp), lambda i, k: (0, 0)),    # bias
            pl.BlockSpec((tm, 1), lambda i, k: (i, 0)),    # targets
        ],
        out_specs=(
            pl.BlockSpec((tm, Kp), lambda i, k: (i, 0)),   # preds (accumulator)
            pl.BlockSpec((tm, 1), lambda i, k: (i, 0)),    # per-row NLL
        ),
        compiler_params=pltpu.CompilerParams(
            dimension_semantics=("parallel", "arbitrary"),
            vmem_limit_bytes=32 * 1024 * 1024,
        ),
        cost_estimate=cost,
    )(x_p, w_p, b_p, t_p)

    # Per-row NLL partials -> scalar mean in the wrapper (batch axis stays
    # fully parallel; padded rows are sliced away before the mean).
    loss = jnp.sum(nll_p[:N, 0]) / N
    preds = preds_p[:N, :K]
    return loss, preds


def _reference(inp, target, weight, bias, matmul_dtype=jnp.bfloat16):
    """Pure-JAX reference using the same matmul input precision as the kernel."""
    N = inp.shape[0]
    D, K = weight.shape
    x = inp.reshape(N, D).astype(jnp.float32)
    logits = jnp.dot(x.astype(matmul_dtype), weight.astype(matmul_dtype),
                     preferred_element_type=jnp.float32) + bias.astype(jnp.float32)
    logp = jax.nn.log_softmax(logits, axis=-1)
    loss = -jnp.mean(logp[jnp.arange(N), target])
    return loss, logits


if __name__ == "__main__":
    # Small shapes consistent with the documented forward: (N, C, H, W), K classes.
    N, C, H, W, K = 2, 4, 16, 16, 8
    D = C * H * W

    key = jax.random.PRNGKey(0)
    k_inp, k_w, k_b, k_t = jax.random.split(key, 4)

    inp = jax.random.normal(k_inp, (N, C, H, W), dtype=jnp.float32)
    target = jax.random.randint(k_t, (N,), 0, K, dtype=jnp.int32)
    # Deterministic "model" parameters (linear classifier over flattened input).
    weight = jax.random.normal(k_w, (D, K), dtype=jnp.float32) * 0.02
    bias = jax.random.normal(k_b, (K,), dtype=jnp.float32) * 0.02

    loss, preds = loss_function_forward(inp, target, weight, bias)
    jax.block_until_ready((loss, preds))

    ref_loss, ref_preds = _reference(inp, target, weight, bias)
    assert preds.shape == (N, K)
    assert jnp.allclose(preds, ref_preds, atol=1e-4, rtol=1e-4)
    assert jnp.allclose(loss, ref_loss, atol=1e-4, rtol=1e-4)

    # Second (still small) check exercising batch padding, multiple sublane
    # rows and the parallel batch axis / in-output accumulation together.
    N2 = 130
    k2i, k2t = jax.random.split(jax.random.PRNGKey(1), 2)
    inp2 = jax.random.normal(k2i, (N2, C, H, W), dtype=jnp.float32)
    target2 = jax.random.randint(k2t, (N2,), 0, K, dtype=jnp.int32)
    loss2, preds2 = loss_function_forward(inp2, target2, weight, bias)
    jax.block_until_ready((loss2, preds2))
    ref_loss2, ref_preds2 = _reference(inp2, target2, weight, bias)
    assert preds2.shape == (N2, K)
    assert jnp.allclose(preds2, ref_preds2, atol=1e-4, rtol=1e-4)
    assert jnp.allclose(loss2, ref_loss2, atol=1e-4, rtol=1e-4)

    print("KERNEL_OK")
</pallas_src>

<mosaic_0001>
module attributes {stable_mosaic.version = 11 : i64} {
  func.func @kernel(%arg0: i32, %arg1: i32, %arg2: memref<8x1024xf32, #tpu.memory_space<vmem>>, %arg3: memref<1024x128xbf16, #tpu.memory_space<vmem>>, %arg4: memref<1x128xf32, #tpu.memory_space<vmem>>, %arg5: memref<8x1xi32, #tpu.memory_space<vmem>>, %arg6: memref<8x128xf32, #tpu.memory_space<vmem>>, %arg7: memref<8x1xf32, #tpu.memory_space<vmem>>) attributes {dimension_semantics = [#tpu.dimension_semantics<parallel>, #tpu.dimension_semantics<arbitrary>], iteration_bounds = array<i64: 1, 1>, scalar_prefetch = 0 : i64, scratch_operands = 0 : i64, tpu.core_type = #tpu.core_type<tc>, window_params = [{transform_indices = @transform_0, window_bounds = array<i64: 8, 1024>}, {pipeline_mode = #tpu.pipeline_mode<synchronous>, transform_indices = @transform_1, window_bounds = array<i64: 1024, 128>}, {pipeline_mode = #tpu.pipeline_mode<synchronous>, transform_indices = @transform_2, window_bounds = array<i64: 1, 128>}, {transform_indices = @transform_3, window_bounds = array<i64: 8, 1>}, {transform_indices = @transform_4, window_bounds = array<i64: 8, 128>}, {transform_indices = @transform_5, window_bounds = array<i64: 8, 1>}]} {
    %c0_i32 = arith.constant 0 : i32
    %0 = arith.cmpi eq, %arg1, %c0_i32 : i32
    %1 = arith.extui %0 : i1 to i32
    %c0_i32_0 = arith.constant 0 : i32
    %2 = arith.cmpi ne, %1, %c0_i32_0 : i32
    scf.if %2 {
      %cst_10 = arith.constant 0.000000e+00 : f32
      %13 = vector.broadcast %cst_10 : f32 to vector<8x128xf32>
      %c0_11 = arith.constant 0 : index
      %c0_12 = arith.constant 0 : index
      %14 = vector.load %arg6[%c0_11, %c0_12] : memref<8x128xf32, #tpu.memory_space<vmem>>, vector<8x128xf32>
      tpu.vector_store %arg6[%c0_11, %c0_12], %13 {strides = array<i32>} : memref<8x128xf32, #tpu.memory_space<vmem>>, vector<8x128xf32>,
    } else {
    }
    %c0 = arith.constant 0 : index
    %c0_1 = arith.constant 0 : index
    %3 = vector.load %arg2[%c0, %c0_1] : memref<8x1024xf32, #tpu.memory_space<vmem>>, vector<8x1024xf32>
    %4 = arith.truncf %3 : vector<8x1024xf32> to vector<8x1024xbf16>
    %c0_2 = arith.constant 0 : index
    %c0_3 = arith.constant 0 : index
    %5 = vector.load %arg3[%c0_2, %c0_3] : memref<1024x128xbf16, #tpu.memory_space<vmem>>, vector<1024x128xbf16>
    %c0_4 = arith.constant 0 : index
    %c0_5 = arith.constant 0 : index
    %6 = vector.load %arg6[%c0_4, %c0_5] : memref<8x128xf32, #tpu.memory_space<vmem>>, vector<8x128xf32>
    %cst = arith.constant dense<0.000000e+00> : vector<8x128xf32>
    %7 = tpu.matmul %4, %5, %cst {dimension_numbers = #tpu.dot_dimension_numbers<[1], [0], [0], [1], [0, 0, 1, 1], [], []>} : vector<8x1024xbf16>, vector<1024x128xbf16>, vector<8x128xf32> -> vector<8x128xf32>
    %8 = arith.addf %6, %7 : vector<8x128xf32>
    %c0_6 = arith.constant 0 : index
    %c0_7 = arith.constant 0 : index
    %9 = vector.load %arg6[%c0_6, %c0_7] : memref<8x128xf32, #tpu.memory_space<vmem>>, vector<8x128xf32>
    tpu.vector_store %arg6[%c0_6, %c0_7], %8 {strides = array<i32>} : memref<8x128xf32, #tpu.memory_space<vmem>>, vector<8x128xf32>,
    %c0_i32_8 = arith.constant 0 : i32
    %10 = arith.cmpi eq, %arg1, %c0_i32_8 : i32
    %11 = arith.extui %10 : i1 to i32
    %c0_i32_9 = arith.constant 0 : i32
    %12 = arith.cmpi ne, %11, %c0_i32_9 : i32
    scf.if %12 {
      %c0_10 = arith.constant 0 : index
      %c0_11 = arith.constant 0 : index
      %13 = vector.load %arg6[%c0_10, %c0_11] : memref<8x128xf32, #tpu.memory_space<vmem>>, vector<8x128xf32>
      %c0_12 = arith.constant 0 : index
      %c0_13 = arith.constant 0 : index
      %14 = vector.load %arg4[%c0_12, %c0_13] : memref<1x128xf32, #tpu.memory_space<vmem>>, vector<1x128xf32>
      %15 = vector.broadcast %14 : vector<1x128xf32> to vector<8x128xf32>
      %16 = arith.addf %13, %15 : vector<8x128xf32>
      %c0_14 = arith.constant 0 : index
      %c0_15 = arith.constant 0 : index
      %17 = vector.load %arg6[%c0_14, %c0_15] : memref<8x128xf32, #tpu.memory_space<vmem>>, vector<8x128xf32>
      tpu.vector_store %arg6[%c0_14, %c0_15], %16 {strides = array<i32>} : memref<8x128xf32, #tpu.memory_space<vmem>>, vector<8x128xf32>,
      %cst_16 = arith.constant dense<0xFF800000> : vector<8xf32>
      %18 = vector.multi_reduction <maximumf>, %16, %cst_16 [1] : vector<8x128xf32> to vector<8xf32>
      %19 = vector.shape_cast %18 : vector<8xf32> to vector<8x1xf32>
      %20 = vector.broadcast %19 : vector<8x1xf32> to vector<8x128xf32>
      %21 = arith.subf %16, %20 : vector<8x128xf32>
      %22 = math.exp %21 : vector<8x128xf32>
      %cst_17 = arith.constant dense<0.000000e+00> : vector<8xf32>
      %23 = vector.multi_reduction <add>, %22, %cst_17 [1] : vector<8x128xf32> to vector<8xf32>
      %24 = vector.shape_cast %23 : vector<8xf32> to vector<8x1xf32>
      %25 = math.log %24 : vector<8x1xf32>
      %26 = tpu.iota {dimensions = array<i32: 1>} : vector<8x128xi32>
      %c0_18 = arith.constant 0 : index
      %c0_19 = arith.constant 0 : index
      %27 = vector.load %arg5[%c0_18, %c0_19] : memref<8x1xi32, #tpu.memory_space<vmem>>, vector<8x1xi32>
      %28 = vector.broadcast %27 : vector<8x1xi32> to vector<8x128xi32>
      %29 = arith.cmpi eq, %26, %28 : vector<8x128xi32>
      %cst_20 = arith.constant 0.000000e+00 : f32
      %30 = vector.broadcast %cst_20 : f32 to vector<8x128xf32>
      %31 = arith.select %29, %21, %30 : vector<8x128xi1>, vector<8x128xf32>
      %cst_21 = arith.constant dense<0.000000e+00> : vector<8xf32>
      %32 = vector.multi_reduction <add>, %31, %cst_21 [1] : vector<8x128xf32> to vector<8xf32>
      %33 = vector.shape_cast %32 : vector<8xf32> to vector<8x1xf32>
      %34 = arith.subf %25, %33 : vector<8x1xf32>
      %c0_22 = arith.constant 0 : index
      %c0_23 = arith.constant 0 : index
      %35 = vector.load %arg7[%c0_22, %c0_23] : memref<8x1xf32, #tpu.memory_space<vmem>>, vector<8x1xf32>
      tpu.vector_store %arg7[%c0_22, %c0_23], %34 {strides = array<i32>} : memref<8x1xf32, #tpu.memory_space<vmem>>, vector<8x1xf32>,
    } else {
    }
    return
  }
  func.func @transform_0(%arg0: i32, %arg1: i32) -> (i32, i32) {
    %c0_i32 = arith.constant 0 : i32
    return %arg0, %arg1 : i32, i32
  }
  func.func @transform_1(%arg0: i32, %arg1: i32) -> (i32, i32) {
    %c0_i32 = arith.constant 0 : i32
    %c0_i32_0 = arith.constant 0 : i32
    %c0_i32_1 = arith.constant 0 : i32
    return %c0_i32, %c0_i32_0 : i32, i32
  }
  func.func @transform_2(%arg0: i32, %arg1: i32) -> (i32, i32) {
    %c0_i32 = arith.constant 0 : i32
    %c0_i32_0 = arith.constant 0 : i32
    %c0_i32_1 = arith.constant 0 : i32
    return %c0_i32, %c0_i32_0 : i32, i32
  }
  func.func @transform_3(%arg0: i32, %arg1: i32) -> (i32, i32) {
    %c0_i32 = arith.constant 0 : i32
    %c0_i32_0 = arith.constant 0 : i32
    return %arg0, %c0_i32 : i32, i32
  }
  func.func @transform_4(%arg0: i32, %arg1: i32) -> (i32, i32) {
    %c0_i32 = arith.constant 0 : i32
    %c0_i32_0 = arith.constant 0 : i32
    return %arg0, %c0_i32 : i32, i32
  }
  func.func @transform_5(%arg0: i32, %arg1: i32) -> (i32, i32) {
    %c0_i32 = arith.constant 0 : i32
    %c0_i32_0 = arith.constant 0 : i32
    return %arg0, %c0_i32 : i32, i32
  }
}

</mosaic_0001>

<llo_original>
// kernel: tpu_custom_call.1
$region0: #{tpu_custom_call.1}
  #allocation0 [shape = 'u32[]', space=smem, size = 0x4, offset = 0x4, fixed_abs, tag = 'smem constant byte address 0x4 - core index']
  #allocation1 [shape = 'u32[144,128]{1,0:T(1,128)}', space=vmem, size = 0x12000, scoped, tag = 'internal scratch']
  %s0 = inlined_call_operand.hbm [shape: f32[8,1024], index: 0, kind: input, shape index: {}]
  %s1 = inlined_call_operand.hbm [shape: bf16[1024,128], index: 1, kind: input, shape index: {}]
  %s2 = inlined_call_operand.vmem [shape: f32[1,128], index: 2, kind: input, shape index: {}]
  %s3 = inlined_call_operand.vmem [shape: s32[8,1], index: 3, kind: input, shape index: {}]
  %s4 = inlined_call_operand.hbm [shape: f32[8,128], index: 4, kind: output, shape index: {0}]
  %s5 = inlined_call_operand.vmem [shape: f32[8,1], index: 5, kind: output, shape index: {1}]
  %6 = xla_tuple %s4, %s5
  %s7 = sld [smem:[#allocation0]]
  $region50: #{tpu_custom_call.1} parent=0
    _
  %s9 = ssub.s32 1, %s7
  %s10 = scalar_select 0, %s9, %s7
  $region1: #{tpu_custom_call.1} parent=0
    #allocation2 [shape = 'u8[32768]{0}', space=vmem, size = 0x8000, scoped, tag = 'input window, operand 0, single buffered']
    #allocation3 [shape = 's32[1]{0}', space=sflag, size = 0x4, scoped, tag = 'scoped memory for tpu_custom_call.1']
    #allocation4 [shape = 's32[1]{0}', space=sflag, size = 0x4, scoped, tag = 'scoped memory for tpu_custom_call.1']
    #allocation5 [shape = 'u8[262144]{0}', space=vmem, size = 0x40000, scoped, tag = 'input window, operand 1, single buffered']
    #allocation6 [shape = 's32[1]{0}', space=sflag, size = 0x4, scoped, tag = 'scoped memory for tpu_custom_call.1']
    #allocation7 [shape = 'u8[4096]{0}', space=vmem, size = 0x1000, scoped, tag = 'output window, operand 0, single buffered']
    %11 = vsyncpa [#allocation3], 0
    %12 = vsyncpa [#allocation6], 0
    %13 = vsyncpa [#allocation4], 0
    // Predicated region
    $region2: #{tpu_custom_call.1} parent=1 // pred_check
      _
    $region3: #{tpu_custom_call.1} parent=1 // pred_check_branch
      %15 = sbr.rel (0) target = $region5
    $region4: #{tpu_custom_call.1} parent=1 // pred_region
      %s17 = ssub.s32 1024, 1024
      %18 = vsyncadd [#allocation3], %s17
      %s20 = sshll.u32 [#allocation2], 4
      %s21 = int_to_ptr.vmem [resolvable:$true] %s20
      %23 = dma.hbm_to_vmem [thread:$0]  %s0, 1024, %s21, [#allocation3]
    $region5: #{tpu_custom_call.1} parent=1 // pred_fallthru
      _
    // Predicated region
    $region6: #{tpu_custom_call.1} parent=1 // pred_check
      _
    $region7: #{tpu_custom_call.1} parent=1 // pred_check_branch
      %25 = sbr.rel (0) target = $region9
    $region8: #{tpu_custom_call.1} parent=1 // pred_region
      %s27 = ssub.s32 8192, 8192
      %28 = vsyncadd [#allocation6], %s27
      %s29 = sshll.u32 [#allocation5], 4
      %s30 = int_to_ptr.vmem [resolvable:$true] %s29
      %35 = dma.hbm_to_vmem [thread:$0]  %s1, 8192, %s30, [#allocation6], 64, 64, 4
    $region9: #{tpu_custom_call.1} parent=1 // pred_fallthru
      _
    // Predicated region
    $region10: #{tpu_custom_call.1} parent=1 // pred_check
      _
    $region11: #{tpu_custom_call.1} parent=1 // pred_check_branch
      %37 = sbr.rel (0) target = $region13
    $region12: #{tpu_custom_call.1} parent=1 // pred_region
      _
    $region13: #{tpu_custom_call.1} parent=1 // pred_fallthru
      _
    // Predicated region
    $region14: #{tpu_custom_call.1} parent=1 // pred_check
      _
    $region15: #{tpu_custom_call.1} parent=1 // pred_check_branch
      %39 = sbr.rel (0) target = $region17
    $region16: #{tpu_custom_call.1} parent=1 // pred_region
      _
    $region17: #{tpu_custom_call.1} parent=1 // pred_fallthru
      _
    // Predicated region
    $region18: #{tpu_custom_call.1} parent=1 // pred_check
      _
    $region19: #{tpu_custom_call.1} parent=1 // pred_check_branch
      %41 = sbr.rel (0) target = $region21
    $region20: #{tpu_custom_call.1} parent=1 // pred_region
      %42 = dma.done [#allocation3], 1024
    $region21: #{tpu_custom_call.1} parent=1 // pred_fallthru
      _
    // Predicated region
    $region22: #{tpu_custom_call.1} parent=1 // pred_check
      _
    $region23: #{tpu_custom_call.1} parent=1 // pred_check_branch
      %44 = sbr.rel (0) target = $region25
    $region24: #{tpu_custom_call.1} parent=1 // pred_region
      %45 = dma.done [#allocation6], 8192
    $region25: #{tpu_custom_call.1} parent=1 // pred_fallthru
      _
    %p47 = scmp.eq.s32.totalorder 0, 0
    // Predicated region
    $region26: #{tpu_custom_call.1} parent=1 // pred_check
      %p48 = pneg %p47
    $region27: #{tpu_custom_call.1} parent=1 // pred_check_branch
      %50 = sbr.rel (%p48) target = $region29
    $region28: #{tpu_custom_call.1} parent=1 // pred_region
      %51 = vst [vmem:[#allocation7] sm:$0xff] 0.0
    $region29: #{tpu_custom_call.1} parent=1 // pred_fallthru
      _
    %v52 = vld [vmem:[#allocation2] sm:$0xff]
    %v53 = vld [vmem:[#allocation2 + $0x8] sm:$0xff]
    %v54 = vld [vmem:[#allocation2 + $0x10] sm:$0xff]
    %v55 = vld [vmem:[#allocation2 + $0x18] sm:$0xff]
    %v56 = vld [vmem:[#allocation2 + $0x20] sm:$0xff]
    %v57 = vld [vmem:[#allocation2 + $0x28] sm:$0xff]
    %v58 = vld [vmem:[#allocation2 + $0x30] sm:$0xff]
    %v59 = vld [vmem:[#allocation2 + $0x38] sm:$0xff]
    %v60 = vpack.c.bf16 %v52, %v52
    %v61 = vpack.c.bf16 %v53, %v53
    %v62 = vpack.c.bf16 %v54, %v54
    %v63 = vpack.c.bf16 %v55, %v55
    %v64 = vpack.c.bf16 %v56, %v56
    %v65 = vpack.c.bf16 %v57, %v57
    %v66 = vpack.c.bf16 %v58, %v58
    %v67 = vpack.c.bf16 %v59, %v59
    %v68 = vld [vmem:[#allocation5] sm:$0xf]
    %v69 = vld [vmem:[#allocation5 + $0x4] sm:$0xf]
    %v70 = vld [vmem:[#allocation5 + $0x8] sm:$0xf]
    %v71 = vld [vmem:[#allocation5 + $0xc] sm:$0xf]
    %v72 = vld [vmem:[#allocation5 + $0x10] sm:$0xf]
    %v73 = vld [vmem:[#allocation5 + $0x14] sm:$0xf]
    %v74 = vld [vmem:[#allocation5 + $0x18] sm:$0xf]
    %v75 = vld [vmem:[#allocation5 + $0x1c] sm:$0xf]
    %v76 = vld [vmem:[#allocation5 + $0x20] sm:$0xf]
    %v77 = vld [vmem:[#allocation5 + $0x24] sm:$0xf]
    %v78 = vld [vmem:[#allocation5 + $0x28] sm:$0xf]
    %v79 = vld [vmem:[#allocation5 + $0x2c] sm:$0xf]
    %v80 = vld [vmem:[#allocation5 + $0x30] sm:$0xf]
    %v81 = vld [vmem:[#allocation5 + $0x34] sm:$0xf]
    %v82 = vld [vmem:[#allocation5 + $0x38] sm:$0xf]
    %v83 = vld [vmem:[#allocation5 + $0x3c] sm:$0xf]
    %v84 = vld [vmem:[#allocation5 + $0x40] sm:$0xf]
    %v85 = vld [vmem:[#allocation5 + $0x44] sm:$0xf]
    %v86 = vld [vmem:[#allocation5 + $0x48] sm:$0xf]
    %v87 = vld [vmem:[#allocation5 + $0x4c] sm:$0xf]
    %v88 = vld [vmem:[#allocation5 + $0x50] sm:$0xf]
    %v89 = vld [vmem:[#allocation5 + $0x54] sm:$0xf]
    %v90 = vld [vmem:[#allocation5 + $0x58] sm:$0xf]
    %v91 = vld [vmem:[#allocation5 + $0x5c] sm:$0xf]
    %v92 = vld [vmem:[#allocation5 + $0x60] sm:$0xf]
    %v93 = vld [vmem:[#allocation5 + $0x64] sm:$0xf]
    %v94 = vld [vmem:[#allocation5 + $0x68] sm:$0xf]
    %v95 = vld [vmem:[#allocation5 + $0x6c] sm:$0xf]
    %v96 = vld [vmem:[#allocation5 + $0x70] sm:$0xf]
    %v97 = vld [vmem:[#allocation5 + $0x74] sm:$0xf]
    %v98 = vld [vmem:[#allocation5 + $0x78] sm:$0xf]
    %v99 = vld [vmem:[#allocation5 + $0x7c] sm:$0xf]
    %v100 = vld [vmem:[#allocation5 + $0x80] sm:$0xf]
    %v101 = vld [vmem:[#allocation5 + $0x84] sm:$0xf]
    %v102 = vld [vmem:[#allocation5 + $0x88] sm:$0xf]
    %v103 = vld [vmem:[#allocation5 + $0x8c] sm:$0xf]
    %v104 = vld [vmem:[#allocation5 + $0x90] sm:$0xf]
    %v105 = vld [vmem:[#allocation5 + $0x94] sm:$0xf]
    %v106 = vld [vmem:[#allocation5 + $0x98] sm:$0xf]
    %v107 = vld [vmem:[#allocation5 + $0x9c] sm:$0xf]
    %v108 = vld [vmem:[#allocation5 + $0xa0] sm:$0xf]
    %v109 = vld [vmem:[#allocation5 + $0xa4] sm:$0xf]
    %v110 = vld [vmem:[#allocation5 + $0xa8] sm:$0xf]
    %v111 = vld [vmem:[#allocation5 + $0xac] sm:$0xf]
    %v112 = vld [vmem:[#allocation5 + $0xb0] sm:$0xf]
    %v113 = vld [vmem:[#allocation5 + $0xb4] sm:$0xf]
    %v114 = vld [vmem:[#allocation5 + $0xb8] sm:$0xf]
    %v115 = vld [vmem:[#allocation5 + $0xbc] sm:$0xf]
    %v116 = vld [vmem:[#allocation5 + $0xc0] sm:$0xf]
    %v117 = vld [vmem:[#allocation5 + $0xc4] sm:$0xf]
    %v118 = vld [vmem:[#allocation5 + $0xc8] sm:$0xf]
    %v119 = vld [vmem:[#allocation5 + $0xcc] sm:$0xf]
    %v120 = vld [vmem:[#allocation5 + $0xd0] sm:$0xf]
    %v121 = vld [vmem:[#allocation5 + $0xd4] sm:$0xf]
    %v122 = vld [vmem:[#allocation5 + $0xd8] sm:$0xf]
    %v123 = vld [vmem:[#allocation5 + $0xdc] sm:$0xf]
    %v124 = vld [vmem:[#allocation5 + $0xe0] sm:$0xf]
    %v125 = vld [vmem:[#allocation5 + $0xe4] sm:$0xf]
    %v126 = vld [vmem:[#allocation5 + $0xe8] sm:$0xf]
    %v127 = vld [vmem:[#allocation5 + $0xec] sm:$0xf]
    %v128 = vld [vmem:[#allocation5 + $0xf0] sm:$0xf]
    %v129 = vld [vmem:[#allocation5 + $0xf4] sm:$0xf]
    %v130 = vld [vmem:[#allocation5 + $0xf8] sm:$0xf]
    %v131 = vld [vmem:[#allocation5 + $0xfc] sm:$0xf]
    %v132 = vld [vmem:[#allocation5 + $0x100] sm:$0xf]
    %v133 = vld [vmem:[#allocation5 + $0x104] sm:$0xf]
    %v134 = vld [vmem:[#allocation5 + $0x108] sm:$0xf]
    %v135 = vld [vmem:[#allocation5 + $0x10c] sm:$0xf]
    %v136 = vld [vmem:[#allocation5 + $0x110] sm:$0xf]
    %v137 = vld [vmem:[#allocation5 + $0x114] sm:$0xf]
    %v138 = vld [vmem:[#allocation5 + $0x118] sm:$0xf]
    %v139 = vld [vmem:[#allocation5 + $0x11c] sm:$0xf]
    %v140 = vld [vmem:[#allocation5 + $0x120] sm:$0xf]
    %v141 = vld [vmem:[#allocation5 + $0x124] sm:$0xf]
    %v142 = vld [vmem:[#allocation5 + $0x128] sm:$0xf]
    %v143 = vld [vmem:[#allocation5 + $0x12c] sm:$0xf]
    %v144 = vld [vmem:[#allocation5 + $0x130] sm:$0xf]
    %v145 = vld [vmem:[#allocation5 + $0x134] sm:$0xf]
    %v146 = vld [vmem:[#allocation5 + $0x138] sm:$0xf]
    %v147 = vld [vmem:[#allocation5 + $0x13c] sm:$0xf]
    %v148 = vld [vmem:[#allocation5 + $0x140] sm:$0xf]
    %v149 = vld [vmem:[#allocation5 + $0x144] sm:$0xf]
    %v150 = vld [vmem:[#allocation5 + $0x148] sm:$0xf]
    %v151 = vld [vmem:[#allocation5 + $0x14c] sm:$0xf]
    %v152 = vld [vmem:[#allocation5 + $0x150] sm:$0xf]
    %v153 = vld [vmem:[#allocation5 + $0x154] sm:$0xf]
    %v154 = vld [vmem:[#allocation5 + $0x158] sm:$0xf]
    %v155 = vld [vmem:[#allocation5 + $0x15c] sm:$0xf]
    %v156 = vld [vmem:[#allocation5 + $0x160] sm:$0xf]
    %v157 = vld [vmem:[#allocation5 + $0x164] sm:$0xf]
    %v158 = vld [vmem:[#allocation5 + $0x168] sm:$0xf]
    %v159 = vld [vmem:[#allocation5 + $0x16c] sm:$0xf]
    %v160 = vld [vmem:[#allocation5 + $0x170] sm:$0xf]
    %v161 = vld [vmem:[#allocation5 + $0x174] sm:$0xf]
    %v162 = vld [vmem:[#allocation5 + $0x178] sm:$0xf]
    %v163 = vld [vmem:[#allocation5 + $0x17c] sm:$0xf]
    %v164 = vld [vmem:[#allocation5 + $0x180] sm:$0xf]
    %v165 = vld [vmem:[#allocation5 + $0x184] sm:$0xf]
    %v166 = vld [vmem:[#allocation5 + $0x188] sm:$0xf]
    %v167 = vld [vmem:[#allocation5 + $0x18c] sm:$0xf]
    %v168 = vld [vmem:[#allocation5 + $0x190] sm:$0xf]
    %v169 = vld [vmem:[#allocation5 + $0x194] sm:$0xf]
    %v170 = vld [vmem:[#allocation5 + $0x198] sm:$0xf]
    %v171 = vld [vmem:[#allocation5 + $0x19c] sm:$0xf]
    %v172 = vld [vmem:[#allocation5 + $0x1a0] sm:$0xf]
    %v173 = vld [vmem:[#allocation5 + $0x1a4] sm:$0xf]
    %v174 = vld [vmem:[#allocation5 + $0x1a8] sm:$0xf]
    %v175 = vld [vmem:[#allocation5 + $0x1ac] sm:$0xf]
    %v176 = vld [vmem:[#allocation5 + $0x1b0] sm:$0xf]
    %v177 = vld [vmem:[#allocation5 + $0x1b4] sm:$0xf]
    %v178 = vld [vmem:[#allocation5 + $0x1b8] sm:$0xf]
    %v179 = vld [vmem:[#allocation5 + $0x1bc] sm:$0xf]
    %v180 = vld [vmem:[#allocation5 + $0x1c0] sm:$0xf]
    %v181 = vld [vmem:[#allocation5 + $0x1c4] sm:$0xf]
    %v182 = vld [vmem:[#allocation5 + $0x1c8] sm:$0xf]
    %v183 = vld [vmem:[#allocation5 + $0x1cc] sm:$0xf]
    %v184 = vld [vmem:[#allocation5 + $0x1d0] sm:$0xf]
    %v185 = vld [vmem:[#allocation5 + $0x1d4] sm:$0xf]
    %v186 = vld [vmem:[#allocation5 + $0x1d8] sm:$0xf]
    %v187 = vld [vmem:[#allocation5 + $0x1dc] sm:$0xf]
    %v188 = vld [vmem:[#allocation5 + $0x1e0] sm:$0xf]
    %v189 = vld [vmem:[#allocation5 + $0x1e4] sm:$0xf]
    %v190 = vld [vmem:[#allocation5 + $0x1e8] sm:$0xf]
    %v191 = vld [vmem:[#allocation5 + $0x1ec] sm:$0xf]
    %v192 = vld [vmem:[#allocation5 + $0x1f0] sm:$0xf]
    %v193 = vld [vmem:[#allocation5 + $0x1f4] sm:$0xf]
    %v194 = vld [vmem:[#allocation5 + $0x1f8] sm:$0xf]
    %v195 = vld [vmem:[#allocation5 + $0x1fc] sm:$0xf]
    %v196 = vld [vmem:[#allocation7] sm:$0xff]
    %v325 = vunpack.c.l.b16 %v68
    %v326 = vunpack.c.l.b16 %v69
    %v327 = vunpack.c.l.b16 %v70
    %v328 = vunpack.c.l.b16 %v71
    %v329 = vunpack.c.l.b16 %v72
    %v330 = vunpack.c.l.b16 %v73
    %v331 = vunpack.c.l.b16 %v74
    %v332 = vunpack.c.l.b16 %v75
    %v333 = vunpack.c.l.b16 %v76
    %v334 = vunpack.c.l.b16 %v77
    %v335 = vunpack.c.l.b16 %v78
    %v336 = vunpack.c.l.b16 %v79
    %v337 = vunpack.c.l.b16 %v80
    %v338 = vunpack.c.l.b16 %v81
    %v339 = vunpack.c.l.b16 %v82
    %v340 = vunpack.c.l.b16 %v83
    %v341 = vunpack.c.l.b16 %v84
    %v342 = vunpack.c.l.b16 %v85
    %v343 = vunpack.c.l.b16 %v86
    %v344 = vunpack.c.l.b16 %v87
    %v345 = vunpack.c.l.b16 %v88
    %v346 = vunpack.c.l.b16 %v89
    %v347 = vunpack.c.l.b16 %v90
    %v348 = vunpack.c.l.b16 %v91
    %v349 = vunpack.c.l.b16 %v92
    %v350 = vunpack.c.l.b16 %v93
    %v351 = vunpack.c.l.b16 %v94
    %v352 = vunpack.c.l.b16 %v95
    %v353 = vunpack.c.l.b16 %v96
    %v354 = vunpack.c.l.b16 %v97
    %v355 = vunpack.c.l.b16 %v98
    %v356 = vunpack.c.l.b16 %v99
    %v357 = vunpack.c.l.b16 %v100
    %v358 = vunpack.c.l.b16 %v101
    %v359 = vunpack.c.l.b16 %v102
    %v360 = vunpack.c.l.b16 %v103
    %v361 = vunpack.c.l.b16 %v104
    %v362 = vunpack.c.l.b16 %v105
    %v363 = vunpack.c.l.b16 %v106
    %v364 = vunpack.c.l.b16 %v107
    %v365 = vunpack.c.l.b16 %v108
    %v366 = vunpack.c.l.b16 %v109
    %v367 = vunpack.c.l.b16 %v110
    %v368 = vunpack.c.l.b16 %v111
    %v369 = vunpack.c.l.b16 %v112
    %v370 = vunpack.c.l.b16 %v113
    %v371 = vunpack.c.l.b16 %v114
    %v372 = vunpack.c.l.b16 %v115
    %v373 = vunpack.c.l.b16 %v116
    %v374 = vunpack.c.l.b16 %v117
    %v375 = vunpack.c.l.b16 %v118
    %v376 = vunpack.c.l.b16 %v119
    %v377 = vunpack.c.l.b16 %v120
    %v378 = vunpack.c.l.b16 %v121
    %v379 = vunpack.c.l.b16 %v122
    %v380 = vunpack.c.l.b16 %v123
    %v381 = vunpack.c.l.b16 %v124
    %v382 = vunpack.c.l.b16 %v125
    %v383 = vunpack.c.l.b16 %v126
    %v384 = vunpack.c.l.b16 %v127
    %v385 = vunpack.c.l.b16 %v128
    %v386 = vunpack.c.l.b16 %v129
    %v387 = vunpack.c.l.b16 %v130
    %v388 = vunpack.c.l.b16 %v131
    %v389 = vunpack.c.l.b16 %v132
    %v390 = vunpack.c.l.b16 %v133
    %v391 = vunpack.c.l.b16 %v134
    %v392 = vunpack.c.l.b16 %v135
    %v393 = vunpack.c.l.b16 %v136
    %v394 = vunpack.c.l.b16 %v137
    %v395 = vunpack.c.l.b16 %v138
    %v396 = vunpack.c.l.b16 %v139
    %v397 = vunpack.c.l.b16 %v140
    %v398 = vunpack.c.l.b16 %v141
    %v399 = vunpack.c.l.b16 %v142
    %v400 = vunpack.c.l.b16 %v143
    %v401 = vunpack.c.l.b16 %v144
    %v402 = vunpack.c.l.b16 %v145
    %v403 = vunpack.c.l.b16 %v146
    %v404 = vunpack.c.l.b16 %v147
    %v405 = vunpack.c.l.b16 %v148
    %v406 = vunpack.c.l.b16 %v149
    %v407 = vunpack.c.l.b16 %v150
    %v408 = vunpack.c.l.b16 %v151
    %v409 = vunpack.c.l.b16 %v152
    %v410 = vunpack.c.l.b16 %v153
    %v411 = vunpack.c.l.b16 %v154
    %v412 = vunpack.c.l.b16 %v155
    %v413 = vunpack.c.l.b16 %v156
    %v414 = vunpack.c.l.b16 %v157
    %v415 = vunpack.c.l.b16 %v158
    %v416 = vunpack.c.l.b16 %v159
    %v417 = vunpack.c.l.b16 %v160
    %v418 = vunpack.c.l.b16 %v161
    %v419 = vunpack.c.l.b16 %v162
    %v420 = vunpack.c.l.b16 %v163
    %v421 = vunpack.c.l.b16 %v164
    %v422 = vunpack.c.l.b16 %v165
    %v423 = vunpack.c.l.b16 %v166
    %v424 = vunpack.c.l.b16 %v167
    %v425 = vunpack.c.l.b16 %v168
    %v426 = vunpack.c.l.b16 %v169
    %v427 = vunpack.c.l.b16 %v170
    %v428 = vunpack.c.l.b16 %v171
    %v429 = vunpack.c.l.b16 %v172
    %v430 = vunpack.c.l.b16 %v173
    %v431 = vunpack.c.l.b16 %v174
    %v432 = vunpack.c.l.b16 %v175
    %v433 = vunpack.c.l.b16 %v176
    %v434 = vunpack.c.l.b16 %v177
    %v435 = vunpack.c.l.b16 %v178
    %v436 = vunpack.c.l.b16 %v179
    %v437 = vunpack.c.l.b16 %v180
    %v438 = vunpack.c.l.b16 %v181
    %v439 = vunpack.c.l.b16 %v182
    %v440 = vunpack.c.l.b16 %v183
    %v441 = vunpack.c.l.b16 %v184
    %v442 = vunpack.c.l.b16 %v185
    %v443 = vunpack.c.l.b16 %v186
    %v444 = vunpack.c.l.b16 %v187
    %v445 = vunpack.c.l.b16 %v188
    %v446 = vunpack.c.l.b16 %v189
    %v447 = vunpack.c.l.b16 %v190
    %v448 = vunpack.c.l.b16 %v191
    %v449 = vunpack.c.l.b16 %v192
    %v450 = vunpack.c.l.b16 %v193
    %v451 = vunpack.c.l.b16 %v194
    %v452 = vunpack.c.l.b16 %v195
    %v453 = vpack.c.b16 %v326, %v325
    %v454 = vpack.c.b16 %v328, %v327
    %v455 = vpack.c.b16 %v330, %v329
    %v456 = vpack.c.b16 %v332, %v331
    %v457 = vpack.c.b16 %v334, %v333
    %v458 = vpack.c.b16 %v336, %v335
    %v459 = vpack.c.b16 %v338, %v337
    %v460 = vpack.c.b16 %v340, %v339
    %v461 = vpack.c.b16 %v342, %v341
    %v462 = vpack.c.b16 %v344, %v343
    %v463 = vpack.c.b16 %v346, %v345
    %v464 = vpack.c.b16 %v348, %v347
    %v465 = vpack.c.b16 %v350, %v349
    %v466 = vpack.c.b16 %v352, %v351
    %v467 = vpack.c.b16 %v354, %v353
    %v468 = vpack.c.b16 %v356, %v355
    %v469 = vpack.c.b16 %v358, %v357
    %v470 = vpack.c.b16 %v360, %v359
    %v471 = vpack.c.b16 %v362, %v361
    %v472 = vpack.c.b16 %v364, %v363
    %v473 = vpack.c.b16 %v366, %v365
    %v474 = vpack.c.b16 %v368, %v367
    %v475 = vpack.c.b16 %v370, %v369
    %v476 = vpack.c.b16 %v372, %v371
    %v477 = vpack.c.b16 %v374, %v373
    %v478 = vpack.c.b16 %v376, %v375
    %v479 = vpack.c.b16 %v378, %v377
    %v480 = vpack.c.b16 %v380, %v379
    %v481 = vpack.c.b16 %v382, %v381
    %v482 = vpack.c.b16 %v384, %v383
    %v483 = vpack.c.b16 %v386, %v385
    %v484 = vpack.c.b16 %v388, %v387
    %v485 = vpack.c.b16 %v390, %v389
    %v486 = vpack.c.b16 %v392, %v391
    %v487 = vpack.c.b16 %v394, %v393
    %v488 = vpack.c.b16 %v396, %v395
    %v489 = vpack.c.b16 %v398, %v397
    %v490 = vpack.c.b16 %v400, %v399
    %v491 = vpack.c.b16 %v402, %v401
    %v492 = vpack.c.b16 %v404, %v403
    %v493 = vpack.c.b16 %v406, %v405
    %v494 = vpack.c.b16 %v408, %v407
    %v495 = vpack.c.b16 %v410, %v409
    %v496 = vpack.c.b16 %v412, %v411
    %v497 = vpack.c.b16 %v414, %v413
    %v498 = vpack.c.b16 %v416, %v415
    %v499 = vpack.c.b16 %v418, %v417
    %v500 = vpack.c.b16 %v420, %v419
    %v501 = vpack.c.b16 %v422, %v421
    %v502 = vpack.c.b16 %v424, %v423
    %v503 = vpack.c.b16 %v426, %v425
    %v504 = vpack.c.b16 %v428, %v427
    %v505 = vpack.c.b16 %v430, %v429
    %v506 = vpack.c.b16 %v432, %v431
    %v507 = vpack.c.b16 %v434, %v433
    %v508 = vpack.c.b16 %v436, %v435
    %v509 = vpack.c.b16 %v438, %v437
    %v510 = vpack.c.b16 %v440, %v439
    %v511 = vpack.c.b16 %v442, %v441
    %v512 = vpack.c.b16 %v444, %v443
    %v513 = vpack.c.b16 %v446, %v445
    %v514 = vpack.c.b16 %v448, %v447
    %v515 = vpack.c.b16 %v450, %v449
    %v516 = vpack.c.b16 %v452, %v451
    %581 = vmatprep.subr.bf16.mxu0 0
    %582 = vmatpush1.bf16.msra.mxu0 %v453
    %583 = vmatprep.subr.bf16.mxu0 0
    %584 = vmatpush1.bf16.msra.mxu0 %v454
    %585 = vmatprep.subr.bf16.mxu0 0
    %586 = vmatpush1.bf16.msra.mxu0 %v455
    %587 = vmatprep.subr.bf16.mxu0 0
    %588 = vmatpush1.bf16.msra.mxu0 %v456
    %589 = vmatprep.subr.bf16.mxu0 0
    %590 = vmatpush1.bf16.msra.mxu0 %v457
    %591 = vmatprep.subr.bf16.mxu0 0
    %592 = vmatpush1.bf16.msra.mxu0 %v458
    %593 = vmatprep.subr.bf16.mxu0 0
    %594 = vmatpush1.bf16.msra.mxu0 %v459
    %595 = vmatprep.subr.bf16.mxu0 0
    %596 = vmatpush1.bf16.msra.mxu0 %v460
    %597 = vmatprep.subr.bf16.mxu0 0
    %598 = vmatpush1.bf16.msra.mxu0 %v461
    %599 = vmatprep.subr.bf16.mxu0 0
    %600 = vmatpush1.bf16.msra.mxu0 %v462
    %601 = vmatprep.subr.bf16.mxu0 0
    %602 = vmatpush1.bf16.msra.mxu0 %v463
    %603 = vmatprep.subr.bf16.mxu0 0
    %604 = vmatpush1.bf16.msra.mxu0 %v464
    %605 = vmatprep.subr.bf16.mxu0 0
    %606 = vmatpush1.bf16.msra.mxu0 %v465
    %607 = vmatprep.subr.bf16.mxu0 0
    %608 = vmatpush1.bf16.msra.mxu0 %v466
    %609 = vmatprep.subr.bf16.mxu0 0
    %610 = vmatpush1.bf16.msra.mxu0 %v467
    %611 = vmatprep.subr.bf16.mxu0 0
    %612 = vmatpush1.bf16.msra.mxu0 %v468
    %613 = vmatprep.mubr.bf16.mxu0 %v61
    %614 = vmatmul.mubr.bf16.gmra.mrb[0].mxu0 %v60
    %v615 = vpop.f32.mrb[0].mxu0
    %v616 = vadd.f32 0.0, %v615
    %v617 = vpop.f32.mrb[0].mxu0
    %v618 = vpop.f32.mrb[0].mxu0
    %v619 = vpop.f32.mrb[0].mxu0
    %620 = vdwg.mxu0
    %621 = vmatprep.subr.bf16.mxu0 0
    %622 = vmatpush1.bf16.msra.mxu0 %v469
    %623 = vmatprep.subr.bf16.mxu0 0
    %624 = vmatpush1.bf16.msra.mxu0 %v470
    %625 = vmatprep.subr.bf16.mxu0 0
    %626 = vmatpush1.bf16.msra.mxu0 %v471
    %627 = vmatprep.subr.bf16.mxu0 0
    %628 = vmatpush1.bf16.msra.mxu0 %v472
    %629 = vmatprep.subr.bf16.mxu0 0
    %630 = vmatpush1.bf16.msra.mxu0 %v473
    %631 = vmatprep.subr.bf16.mxu0 0
    %632 = vmatpush1.bf16.msra.mxu0 %v474
    %633 = vmatprep.subr.bf16.mxu0 0
    %634 = vmatpush1.bf16.msra.mxu0 %v475
    %635 = vmatprep.subr.bf16.mxu0 0
    %636 = vmatpush1.bf16.msra.mxu0 %v476
    %637 = vmatprep.subr.bf16.mxu0 0
    %638 = vmatpush1.bf16.msra.mxu0 %v477
    %639 = vmatprep.subr.bf16.mxu0 0
    %640 = vmatpush1.bf16.msra.mxu0 %v478
    %641 = vmatprep.subr.bf16.mxu0 0
    %642 = vmatpush1.bf16.msra.mxu0 %v479
    %643 = vmatprep.subr.bf16.mxu0 0
    %644 = vmatpush1.bf16.msra.mxu0 %v480
    %645 = vmatprep.subr.bf16.mxu0 0
    %646 = vmatpush1.bf16.msra.mxu0 %v481
    %647 = vmatprep.subr.bf16.mxu0 0
    %648 = vmatpush1.bf16.msra.mxu0 %v482
    %649 = vmatprep.subr.bf16.mxu0 0
    %650 = vmatpush1.bf16.msra.mxu0 %v483
    %651 = vmatprep.subr.bf16.mxu0 0
    %652 = vmatpush1.bf16.msra.mxu0 %v484
    %653 = vmatprep.mubr.bf16.mxu0 %v63
    %654 = vmatmul.mubr.bf16.gmra.mrb[0].mxu0 %v62
    %v655 = vpop.f32.mrb[0].mxu0
    %v656 = vadd.f32 %v616, %v655
    %v657 = vpop.f32.mrb[0].mxu0
    %v658 = vpop.f32.mrb[0].mxu0
    %v659 = vpop.f32.mrb[0].mxu0
    %660 = vdwg.mxu0
    %661 = vmatprep.subr.bf16.mxu0 0
    %662 = vmatpush1.bf16.msra.mxu0 %v485
    %663 = vmatprep.subr.bf16.mxu0 0
    %664 = vmatpush1.bf16.msra.mxu0 %v486
    %665 = vmatprep.subr.bf16.mxu0 0
    %666 = vmatpush1.bf16.msra.mxu0 %v487
    %667 = vmatprep.subr.bf16.mxu0 0
    %668 = vmatpush1.bf16.msra.mxu0 %v488
    %669 = vmatprep.subr.bf16.mxu0 0
    %670 = vmatpush1.bf16.msra.mxu0 %v489
    %671 = vmatprep.subr.bf16.mxu0 0
    %672 = vmatpush1.bf16.msra.mxu0 %v490
    %673 = vmatprep.subr.bf16.mxu0 0
    %674 = vmatpush1.bf16.msra.mxu0 %v491
    %675 = vmatprep.subr.bf16.mxu0 0
    %676 = vmatpush1.bf16.msra.mxu0 %v492
    %677 = vmatprep.subr.bf16.mxu0 0
    %678 = vmatpush1.bf16.msra.mxu0 %v493
    %679 = vmatprep.subr.bf16.mxu0 0
    %680 = vmatpush1.bf16.msra.mxu0 %v494
    %681 = vmatprep.subr.bf16.mxu0 0
    %682 = vmatpush1.bf16.msra.mxu0 %v495
    %683 = vmatprep.subr.bf16.mxu0 0
    %684 = vmatpush1.bf16.msra.mxu0 %v496
    %685 = vmatprep.subr.bf16.mxu0 0
    %686 = vmatpush1.bf16.msra.mxu0 %v497
    %687 = vmatprep.subr.bf16.mxu0 0
    %688 = vmatpush1.bf16.msra.mxu0 %v498
    %689 = vmatprep.subr.bf16.mxu0 0
    %690 = vmatpush1.bf16.msra.mxu0 %v499
    %691 = vmatprep.subr.bf16.mxu0 0
    %692 = vmatpush1.bf16.msra.mxu0 %v500
    %693 = vmatprep.mubr.bf16.mxu0 %v65
    %694 = vmatmul.mubr.bf16.gmra.mrb[0].mxu0 %v64
    %v695 = vpop.f32.mrb[0].mxu0
    %v696 = vadd.f32 %v656, %v695
    %v697 = vpop.f32.mrb[0].mxu0
    %v698 = vpop.f32.mrb[0].mxu0
    %v699 = vpop.f32.mrb[0].mxu0
    %700 = vdwg.mxu0
    %701 = vmatprep.subr.bf16.mxu0 0
    %702 = vmatpush1.bf16.msra.mxu0 %v501
    %703 = vmatprep.subr.bf16.mxu0 0
    %704 = vmatpush1.bf16.msra.mxu0 %v502
    %705 = vmatprep.subr.bf16.mxu0 0
    %706 = vmatpush1.bf16.msra.mxu0 %v503
    %707 = vmatprep.subr.bf16.mxu0 0
    %708 = vmatpush1.bf16.msra.mxu0 %v504
    %709 = vmatprep.subr.bf16.mxu0 0
    %710 = vmatpush1.bf16.msra.mxu0 %v505
    %711 = vmatprep.subr.bf16.mxu0 0
    %712 = vmatpush1.bf16.msra.mxu0 %v506
    %713 = vmatprep.subr.bf16.mxu0 0
    %714 = vmatpush1.bf16.msra.mxu0 %v507
    %715 = vmatprep.subr.bf16.mxu0 0
    %716 = vmatpush1.bf16.msra.mxu0 %v508
    %717 = vmatprep.subr.bf16.mxu0 0
    %718 = vmatpush1.bf16.msra.mxu0 %v509
    %719 = vmatprep.subr.bf16.mxu0 0
    %720 = vmatpush1.bf16.msra.mxu0 %v510
    %721 = vmatprep.subr.bf16.mxu0 0
    %722 = vmatpush1.bf16.msra.mxu0 %v511
    %723 = vmatprep.subr.bf16.mxu0 0
    %724 = vmatpush1.bf16.msra.mxu0 %v512
    %725 = vmatprep.subr.bf16.mxu0 0
    %726 = vmatpush1.bf16.msra.mxu0 %v513
    %727 = vmatprep.subr.bf16.mxu0 0
    %728 = vmatpush1.bf16.msra.mxu0 %v514
    %729 = vmatprep.subr.bf16.mxu0 0
    %730 = vmatpush1.bf16.msra.mxu0 %v515
    %731 = vmatprep.subr.bf16.mxu0 0
    %732 = vmatpush1.bf16.msra.mxu0 %v516
    %733 = vmatprep.mubr.bf16.mxu0 %v67
    %734 = vmatmul.mubr.bf16.gmra.mrb[0].mxu0 %v66
    %v735 = vpop.f32.mrb[0].mxu0
    %v736 = vadd.f32 %v696, %v735
    %v737 = vpop.f32.mrb[0].mxu0
    %v738 = vpop.f32.mrb[0].mxu0
    %v739 = vpop.f32.mrb[0].mxu0
    %740 = vdwg.mxu0
    %v741 = vadd.f32 %v196, %v736
    %742 = vst [vmem:[#allocation7] sm:$0xff] %v741
    // Predicated region
    $region30: #{tpu_custom_call.1} parent=1 // pred_check
      %p743 = pneg %p47
    $region31: #{tpu_custom_call.1} parent=1 // pred_check_branch
      %745 = sbr.rel (%p743) target = $region33
    $region32: #{tpu_custom_call.1} parent=1 // pred_region
      %v746 = vld [vmem:[#allocation7] sm:$0xff]
      %v747 = vld [vmem:[%s2] sm:$0x1]
      %v749 = vlaneseq
      %v750 = vshrl.u32 %v749, 7
      %v751 = vsub.s32 0, %v750
      %v752 = vrot.slane %v747, %v751
      %v754 = vadd.f32 %v746, %v752
      %755 = vst [vmem:[#allocation7] sm:$0xff] %v754
      %756 = vmax.xlane.f32.xlu0 %v754
      %v757 = vpop.xlane.xlu0 %756
      %v758 = vsub.f32 %v754, %v757
      %v759 = vmul.f32 %v758, 1.442695
      %v760 = vpow.pop %v759
      %761 = vadd.xlane.f32.xlu0 %v760
      %v762 = vpop.xlane.xlu0 %761
      %v763 = vlog2.pop %v762
      %v764 = vmul.f32 %v763, 0.6931472
      %v765 = vlaneseq
      %v766 = vand.u32 %v765, 127
      %v767 = vld [vmem:[%s3] sm:$0xff]
      %768 = vset.pattern.permute.xlu0 0
      %769 = vperm.xlu0 %768, %v767
      %v770 = vpop.permute.xlu0 %769
      %vm771 = vcmp.eq.s32.totalorder %v766, %v770
      %v772 = vsel %vm771, %v758, 0.0
      %773 = vadd.xlane.f32.xlu0 %v772
      %v774 = vpop.xlane.xlu0 %773
      %v775 = vsub.f32 %v764, %v774
      %vm776 = vcmask 7168
      %777 = vst.msk [vmem:[%s5] sm:$0xff] %vm776, %v775
    $region33: #{tpu_custom_call.1} parent=1 // pred_fallthru
      _
    // Predicated region
    $region34: #{tpu_custom_call.1} parent=1 // pred_check
      _
    $region35: #{tpu_custom_call.1} parent=1 // pred_check_branch
      %779 = sbr.rel (0) target = $region37
    $region36: #{tpu_custom_call.1} parent=1 // pred_region
      %s781 = ssub.s32 128, 128
      %782 = vsyncadd [#allocation4], %s781
      %s784 = sshll.u32 [#allocation7], 4
      %s785 = int_to_ptr.vmem [resolvable:$true] %s784
      %787 = dma.vmem_to_hbm [thread:$0]  %s785, 128, %s4, [#allocation4]
    $region37: #{tpu_custom_call.1} parent=1 // pred_fallthru
      _
    // Predicated region
    $region38: #{tpu_custom_call.1} parent=1 // pred_check
      _
    $region39: #{tpu_custom_call.1} parent=1 // pred_check_branch
      %789 = sbr.rel (0) target = $region41
    $region40: #{tpu_custom_call.1} parent=1 // pred_region
      _
    $region41: #{tpu_custom_call.1} parent=1 // pred_fallthru
      _
    // Predicated region
    $region42: #{tpu_custom_call.1} parent=1 // pred_check
      _
    $region43: #{tpu_custom_call.1} parent=1 // pred_check_branch
      %791 = sbr.rel (0) target = $region45
    $region44: #{tpu_custom_call.1} parent=1 // pred_region
      %792 = dma.done [#allocation4], 128
    $region45: #{tpu_custom_call.1} parent=1 // pred_fallthru
      _
    // Predicated region
    $region46: #{tpu_custom_call.1} parent=1 // pred_check
      _
    $region47: #{tpu_custom_call.1} parent=1 // pred_check_branch
      %794 = sbr.rel (0) target = $region49
    $region48: #{tpu_custom_call.1} parent=1 // pred_region
      _
    $region49: #{tpu_custom_call.1} parent=1 // pred_fallthru
      _
    %795 = vsyncpa [#allocation3], 1
    %796 = vsyncpa [#allocation6], 1
    %797 = vsyncpa [#allocation4], 1

</llo_original>
